<compile_context>
chip_gen: v7x
topology: tpu7x:2x2x1
jax: 0.10.0
libtpu: 0.0.40
codegen_flags: <defaults>
</compile_context>

<pallas_src>
import functools

import jax
import jax.numpy as jnp
from jax import lax
from jax.experimental import pallas as pl
from jax.experimental.pallas import tpu as pltpu


def _int_pow(x, n):
    """x**n for a non-negative integer n via repeated squaring (VPU muls only)."""
    if n == 0:
        return jnp.ones_like(x)
    result = None
    base = x
    while n > 0:
        if n & 1:
            result = base if result is None else result * base
        n >>= 1
        if n:
            base = base * base
    return result


def _focal_loss_kernel(x_ref, t_ref, out_ref, *, gamma, hw_valid, tile_hw,
                       n_inner, mask_from, needs_mask):
    """One (bb, C, tile) logits block; accumulate per-pixel loss into (bb,1,tile)."""
    o = pl.program_id(1)          # outer HW-split axis (parallel)
    j = pl.program_id(2)          # inner HW reduction axis (arbitrary)
    g = o * n_inner + j           # global HW-tile index

    @pl.when(j == 0)
    def _():
        out_ref[...] = jnp.zeros_like(out_ref)

    x = x_ref[...].astype(jnp.float32)      # (bb, C, T): classes on sublanes, pixels on lanes
    t = t_ref[...]                          # (bb, 1, T) int32 targets

    # log-softmax over the class (sublane) axis, numerically stable.
    m = jnp.max(x, axis=1, keepdims=True)           # (bb, 1, T)
    z = x - m
    ez = jnp.exp(z)                                 # only C transcendentals per pixel
    sumexp = jnp.sum(ez, axis=1, keepdims=True)     # (bb, 1, T)

    # gather(1, target) as a one-hot masked reduction over classes.
    # TODO(synk): out-of-range targets silently give loss 0 here (PyTorch gather errors).
    cls = lax.broadcasted_iota(jnp.int32, x.shape, 1)
    onehot = cls == t                               # (bb, C, T)
    z_t = jnp.sum(jnp.where(onehot, z, 0.0), axis=1, keepdims=True)   # (bb, 1, T)
    e_t = jnp.sum(jnp.where(onehot, ez, 0.0), axis=1, keepdims=True)  # (bb, 1, T)

    logpt = z_t - jnp.log(sumexp)                   # (bb, 1, T)
    # pt reuses the already-computed exp(z): one fewer exp per pixel than exp(logpt).
    # (approx=True would shave another EUP op on v7x but its relative error is
    #  amplified by gamma; keep the exact path for f32 fidelity.)
    pt = e_t * pl.reciprocal(sumexp)

    # focal weight (1 - pt) ** gamma
    q = jnp.maximum(1.0 - pt, 0.0)                  # clamp tiny negative rounding
    if float(gamma) == int(gamma) and gamma >= 0:
        w = _int_pow(q, int(gamma))                 # gamma=7 -> 4 VPU multiplies
    else:
        w = q ** jnp.float32(gamma)                 # non-integer gamma fallback
    loss = -w * logpt                               # (bb, 1, T)

    if not needs_mask:
        out_ref[...] += loss
    else:
        # Only the ragged last HW tile (and any phantom tile from the hw_outer
        # split) pays for the iota/compare/select; all other steps take the cheap
        # unmasked accumulate.
        @pl.when(g < mask_from)
        def _():
            out_ref[...] += loss

        @pl.when(g >= mask_from)
        def _():
            col = g * tile_hw + lax.broadcasted_iota(jnp.int32, loss.shape, 2)
            out_ref[...] += jnp.where(col < hw_valid, loss, 0.0)


def _round_up(v, m):
    return ((v + m - 1) // m) * m


def focal_loss(x, target, *, gamma=7.0, alpha=None, size_average=True,
               tile_hw=None):
    """Focal loss forward.  x: (B, C, H, W) float logits; target: (B, H, W) int."""
    # TODO(synk): alpha (per-class weighting) path not implemented — module default is None.
    assert alpha is None, "alpha path not implemented"

    if x.ndim > 2:
        b, c = x.shape[0], x.shape[1]
        x3 = x.reshape(b, c, -1)            # (B, C, HW): free reshape, no transpose
    else:
        # Rarely-used 2-D (N, C) fallback: samples go on the lane axis (this one
        # does transpose in the wrapper).
        n, c = x.shape
        b = 1
        x3 = x.T[None]                      # (1, C, N)
    hw = x3.shape[2]
    n_total = b * hw

    t3 = target.reshape(b, 1, hw).astype(jnp.int32)   # (B, 1, HW)

    # ---- generation-aware VMEM budget & tile sizing -------------------------
    itemsize = jnp.dtype(x3.dtype).itemsize
    try:
        vmem_cap = int(getattr(pltpu.get_tpu_info(), "vmem_capacity_bytes",
                               64 * 1024 * 1024))
    except Exception:
        vmem_cap = 64 * 1024 * 1024
    if vmem_cap >= 96 * 1024 * 1024:        # v5e / v6e: 128 MiB physical VMEM
        vmem_limit = 64 * 1024 * 1024
    else:                                   # v7x: 64 MiB physical VMEM
        vmem_limit = 32 * 1024 * 1024
    work_budget = (vmem_limit * 3) // 4     # headroom for compiler scratch

    # Bytes per (batch-row, pixel-column) element of one grid step:
    #   2x double-buffered logits + ~3 (C, tile) f32 intermediates (z/exp/select)
    #   + 2x int32 targets + a few (1, tile) f32 temps + the resident output block.
    per_elem = c * (2 * itemsize + 3 * 4) + 2 * 4 + 6 * 4
    max_cols = max(128, (work_budget // per_elem) // 128 * 128)

    tile = min(_round_up(hw, 128), max_cols)
    if tile_hw is not None:                 # user override (still capped by budget)
        tile = min(max(128, _round_up(int(tile_hw), 128)), max_cols)
    total_tiles = pl.cdiv(hw, tile)

    # Fold multiple batch rows into one block when HW is small so per-step bytes
    # stay in the MiB range (per-step overhead amortization for small images).
    bb = 1
    if total_tiles == 1 and b > 1:
        desired = max(1, max_cols // tile)
        bb = max(d for d in range(1, min(b, desired) + 1) if b % d == 0)
    nb = b // bb

    # Outer "parallel" HW split: keeps v7x's second TensorCore busy when the
    # batch-block axis alone is 1 (or odd).  No effect on single-TC v5e/v6e.
    n_outer = 2 if (nb % 2 == 1 and total_tiles >= 2) else 1
    n_inner = pl.cdiv(total_tiles, n_outer)

    mask_from = total_tiles - (1 if hw % tile != 0 else 0)
    needs_mask = mask_from < n_outer * n_inner

    if n_outer * n_inner == total_tiles:
        col_block = lambda o, j: o * n_inner + j
    else:
        # Clamp the (at most one) phantom step's DMA in-bounds; the kernel's
        # column mask zeroes its contribution.
        col_block = lambda o, j: jnp.minimum(o * n_inner + j, total_tiles - 1)

    kernel = functools.partial(
        _focal_loss_kernel, gamma=float(gamma), hw_valid=hw, tile_hw=tile,
        n_inner=n_inner, mask_from=mask_from, needs_mask=needs_mask)

    partial_sums = pl.pallas_call(
        kernel,
        out_shape=jax.ShapeDtypeStruct((b, n_outer, 1, tile), jnp.float32),
        grid_spec=pltpu.PrefetchScalarGridSpec(
            num_scalar_prefetch=0,
            grid=(nb, n_outer, n_inner),
            in_specs=[
                pl.BlockSpec((bb, c, tile),
                             lambda i, o, j: (i, 0, col_block(o, j))),
                pl.BlockSpec((bb, 1, tile),
                             lambda i, o, j: (i, 0, col_block(o, j))),
            ],
            out_specs=pl.BlockSpec((bb, None, 1, tile),
                                   lambda i, o, j: (i, o, 0, 0)),
        ),
        compiler_params=pltpu.CompilerParams(
            dimension_semantics=("parallel", "parallel", "arbitrary"),
            vmem_limit_bytes=vmem_limit,
        ),
    )(x3, t3)

    total = jnp.sum(partial_sums)           # tiny (B, n_outer, 1, tile) reduce in XLA
    if size_average:
        return total / jnp.float32(n_total)
    return total


def _reference(x, target, gamma=7.0, size_average=True):
    """Pure-JAX replica of the PyTorch forward (for validation only)."""
    b, c = x.shape[0], x.shape[1]
    x2 = x.reshape(b, c, -1)
    x2 = jnp.transpose(x2, (0, 2, 1)).reshape(-1, c)
    t = target.reshape(-1)
    logp = jax.nn.log_softmax(x2, axis=1)
    logpt = jnp.take_along_axis(logp, t[:, None], axis=1)[:, 0]
    pt = jnp.exp(logpt)
    loss = -((1.0 - pt) ** gamma) * logpt
    return loss.mean() if size_average else loss.sum()


if __name__ == "__main__":
    # FocalLoss(gamma=7, alpha=None, size_average=True)
    key = jax.random.PRNGKey(0)

    # 1) Primary case: B=2, C=4, 16x16 (batch rows folded into one lane-dense block).
    B, C, H, W = 2, 4, 16, 16
    kx, kt = jax.random.split(key)
    x = jax.random.normal(kx, (B, C, H, W), dtype=jnp.float32)
    target = jax.random.randint(kt, (B, H, W), 0, C, dtype=jnp.int32)
    loss = jax.block_until_ready(focal_loss(x, target, gamma=7.0, size_average=True))
    ref = _reference(x, target, gamma=7.0, size_average=True)
    assert jnp.allclose(loss, ref, rtol=1e-4, atol=1e-6), (loss, ref)

    # 2) Multi-tile reduction with a ragged (masked) last HW tile, no wrapper pad.
    kx2, kt2 = jax.random.split(jax.random.PRNGKey(1))
    x2 = jax.random.normal(kx2, (2, 4, 16, 10), dtype=jnp.float32)
    t2 = jax.random.randint(kt2, (2, 16, 10), 0, 4, dtype=jnp.int32)
    loss2 = jax.block_until_ready(focal_loss(x2, t2, gamma=7.0, tile_hw=128))
    ref2 = _reference(x2, t2, gamma=7.0)
    assert jnp.allclose(loss2, ref2, rtol=1e-4, atol=1e-6), (loss2, ref2)

    # 3) B == 1: HW axis split over the extra parallel grid axis (v7x megacore path).
    kx3, kt3 = jax.random.split(jax.random.PRNGKey(2))
    x3 = jax.random.normal(kx3, (1, 4, 16, 16), dtype=jnp.float32)
    t3 = jax.random.randint(kt3, (1, 16, 16), 0, 4, dtype=jnp.int32)
    loss3 = jax.block_until_ready(focal_loss(x3, t3, gamma=7.0, tile_hw=128))
    ref3 = _reference(x3, t3, gamma=7.0)
    assert jnp.allclose(loss3, ref3, rtol=1e-4, atol=1e-6), (loss3, ref3)

    print("KERNEL_OK")
</pallas_src>

<mosaic_0001>
module attributes {stable_mosaic.version = 11 : i64} {
  func.func @_focal_loss_kernel(%arg0: i32, %arg1: i32, %arg2: i32, %arg3: memref<2x4x256xf32, #tpu.memory_space<vmem>>, %arg4: memref<2x1x256xi32, #tpu.memory_space<vmem>>, %arg5: memref<2x1x1x256xf32, #tpu.memory_space<vmem>>) attributes {dimension_semantics = [#tpu.dimension_semantics<parallel>, #tpu.dimension_semantics<parallel>, #tpu.dimension_semantics<arbitrary>], iteration_bounds = array<i64: 1, 1, 1>, scalar_prefetch = 0 : i64, scratch_operands = 0 : i64, tpu.core_type = #tpu.core_type<tc>, window_params = [{transform_indices = @transform_0, window_bounds = array<i64: 2, 4, 256>}, {transform_indices = @transform_1, window_bounds = array<i64: 2, 1, 256>}, {transform_indices = @transform_2, window_bounds = array<i64: 2, 1, 1, 256>}]} {
    %c0_i32 = arith.constant 0 : i32
    %0 = arith.cmpi eq, %arg2, %c0_i32 : i32
    %1 = arith.extui %0 : i1 to i32
    %c0_i32_0 = arith.constant 0 : i32
    %2 = arith.cmpi ne, %1, %c0_i32_0 : i32
    scf.if %2 {
      %cst_22 = arith.constant 0.000000e+00 : f32
      %44 = vector.broadcast %cst_22 : f32 to vector<2x1x256xf32>
      %c0_23 = arith.constant 0 : index
      %c0_24 = arith.constant 0 : index
      %c0_25 = arith.constant 0 : index
      %c0_26 = arith.constant 0 : index
      %45 = vector.load %arg5[%c0_23, %c0_24, %c0_25, %c0_26] : memref<2x1x1x256xf32, #tpu.memory_space<vmem>>, vector<2x1x1x256xf32>
      %46 = vector.shape_cast %45 : vector<2x1x1x256xf32> to vector<2x1x256xf32>
      %47 = vector.shape_cast %44 : vector<2x1x256xf32> to vector<2x1x1x256xf32>
      tpu.vector_store %arg5[%c0_23, %c0_24, %c0_25, %c0_26], %47 {strides = array<i32>} : memref<2x1x1x256xf32, #tpu.memory_space<vmem>>, vector<2x1x1x256xf32>,
    } else {
    }
    %c0 = arith.constant 0 : index
    %c0_1 = arith.constant 0 : index
    %c0_2 = arith.constant 0 : index
    %3 = vector.load %arg3[%c0, %c0_1, %c0_2] : memref<2x4x256xf32, #tpu.memory_space<vmem>>, vector<2x4x256xf32>
    %c0_3 = arith.constant 0 : index
    %c0_4 = arith.constant 0 : index
    %c0_5 = arith.constant 0 : index
    %4 = vector.load %arg4[%c0_3, %c0_4, %c0_5] : memref<2x1x256xi32, #tpu.memory_space<vmem>>, vector<2x1x256xi32>
    %cst = arith.constant dense<0xFF800000> : vector<2x256xf32>
    %5 = vector.multi_reduction <maximumf>, %3, %cst [1] : vector<2x4x256xf32> to vector<2x256xf32>
    %6 = vector.shape_cast %5 : vector<2x256xf32> to vector<2x1x256xf32>
    %7 = vector.broadcast %6 : vector<2x1x256xf32> to vector<2x4x256xf32>
    %8 = arith.subf %3, %7 : vector<2x4x256xf32>
    %9 = math.exp %8 : vector<2x4x256xf32>
    %cst_6 = arith.constant dense<0.000000e+00> : vector<2x256xf32>
    %10 = vector.multi_reduction <add>, %9, %cst_6 [1] : vector<2x4x256xf32> to vector<2x256xf32>
    %11 = vector.shape_cast %10 : vector<2x256xf32> to vector<2x1x256xf32>
    %12 = tpu.iota {dimensions = array<i32: 1>} : vector<2x4x256xi32>
    %13 = vector.broadcast %4 : vector<2x1x256xi32> to vector<2x4x256xi32>
    %14 = arith.cmpi eq, %12, %13 : vector<2x4x256xi32>
    %cst_7 = arith.constant 0.000000e+00 : f32
    %15 = vector.broadcast %cst_7 : f32 to vector<2x4x256xf32>
    %16 = arith.select %14, %8, %15 : vector<2x4x256xi1>, vector<2x4x256xf32>
    %cst_8 = arith.constant dense<0.000000e+00> : vector<2x256xf32>
    %17 = vector.multi_reduction <add>, %16, %cst_8 [1] : vector<2x4x256xf32> to vector<2x256xf32>
    %18 = vector.shape_cast %17 : vector<2x256xf32> to vector<2x1x256xf32>
    %cst_9 = arith.constant 0.000000e+00 : f32
    %19 = vector.broadcast %cst_9 : f32 to vector<2x4x256xf32>
    %20 = arith.select %14, %9, %19 : vector<2x4x256xi1>, vector<2x4x256xf32>
    %cst_10 = arith.constant dense<0.000000e+00> : vector<2x256xf32>
    %21 = vector.multi_reduction <add>, %20, %cst_10 [1] : vector<2x4x256xf32> to vector<2x256xf32>
    %22 = vector.shape_cast %21 : vector<2x256xf32> to vector<2x1x256xf32>
    %23 = math.log %11 : vector<2x1x256xf32>
    %24 = arith.subf %18, %23 : vector<2x1x256xf32>
    %25 = tpu.reciprocal %11 : vector<2x1x256xf32> -> vector<2x1x256xf32>
    %26 = arith.mulf %22, %25 : vector<2x1x256xf32>
    %cst_11 = arith.constant 1.000000e+00 : f32
    %27 = vector.broadcast %cst_11 : f32 to vector<2x1x256xf32>
    %28 = arith.subf %27, %26 : vector<2x1x256xf32>
    %cst_12 = arith.constant 0.000000e+00 : f32
    %29 = vector.broadcast %cst_12 : f32 to vector<2x1x256xf32>
    %30 = arith.maximumf %28, %29 : vector<2x1x256xf32>
    %31 = arith.mulf %30, %30 : vector<2x1x256xf32>
    %32 = arith.mulf %30, %31 : vector<2x1x256xf32>
    %33 = arith.mulf %31, %31 : vector<2x1x256xf32>
    %34 = arith.mulf %32, %33 : vector<2x1x256xf32>
    %cst_13 = arith.constant 0.000000e+00 : f32
    %35 = vector.broadcast %cst_13 : f32 to vector<2x1x256xf32>
    %36 = arith.subf %35, %34 : vector<2x1x256xf32>
    %37 = arith.mulf %36, %24 : vector<2x1x256xf32>
    %c0_14 = arith.constant 0 : index
    %c0_15 = arith.constant 0 : index
    %c0_16 = arith.constant 0 : index
    %c0_17 = arith.constant 0 : index
    %38 = vector.load %arg5[%c0_14, %c0_15, %c0_16, %c0_17] : memref<2x1x1x256xf32, #tpu.memory_space<vmem>>, vector<2x1x1x256xf32>
    %39 = vector.shape_cast %38 : vector<2x1x1x256xf32> to vector<2x1x256xf32>
    %40 = arith.addf %39, %37 : vector<2x1x256xf32>
    %c0_18 = arith.constant 0 : index
    %c0_19 = arith.constant 0 : index
    %c0_20 = arith.constant 0 : index
    %c0_21 = arith.constant 0 : index
    %41 = vector.load %arg5[%c0_18, %c0_19, %c0_20, %c0_21] : memref<2x1x1x256xf32, #tpu.memory_space<vmem>>, vector<2x1x1x256xf32>
    %42 = vector.shape_cast %41 : vector<2x1x1x256xf32> to vector<2x1x256xf32>
    %43 = vector.shape_cast %40 : vector<2x1x256xf32> to vector<2x1x1x256xf32>
    tpu.vector_store %arg5[%c0_18, %c0_19, %c0_20, %c0_21], %43 {strides = array<i32>} : memref<2x1x1x256xf32, #tpu.memory_space<vmem>>, vector<2x1x1x256xf32>,
    return
  }
  func.func @transform_0(%arg0: i32, %arg1: i32, %arg2: i32) -> (i32, i32, i32) {
    %c1_i32 = arith.constant 1 : i32
    %0 = arith.muli %arg1, %c1_i32 : i32
    %1 = arith.addi %0, %arg2 : i32
    %c0_i32 = arith.constant 0 : i32
    %c0_i32_0 = arith.constant 0 : i32
    return %arg0, %c0_i32, %1 : i32, i32, i32
  }
  func.func @transform_1(%arg0: i32, %arg1: i32, %arg2: i32) -> (i32, i32, i32) {
    %c1_i32 = arith.constant 1 : i32
    %0 = arith.muli %arg1, %c1_i32 : i32
    %1 = arith.addi %0, %arg2 : i32
    %c0_i32 = arith.constant 0 : i32
    %c0_i32_0 = arith.constant 0 : i32
    return %arg0, %c0_i32, %1 : i32, i32, i32
  }
  func.func @transform_2(%arg0: i32, %arg1: i32, %arg2: i32) -> (i32, i32, i32, i32) {
    %c0_i32 = arith.constant 0 : i32
    %c0_i32_0 = arith.constant 0 : i32
    %c0_i32_1 = arith.constant 0 : i32
    return %arg0, %arg1, %c0_i32, %c0_i32_0 : i32, i32, i32, i32
  }
}

</mosaic_0001>

<llo_original>
// kernel: tpu_custom_call.1
$region0: #{tpu_custom_call.1}
  #allocation0 [shape = 'u32[]', space=smem, size = 0x4, offset = 0x4, fixed_abs, tag = 'smem constant byte address 0x4 - core index']
  #allocation1 [shape = 'u32[144,128]{1,0:T(1,128)}', space=vmem, size = 0x12000, scoped, tag = 'internal scratch']
  %s0 = inlined_call_operand.hbm [shape: f32[2,4,256], index: 0, kind: input, shape index: {}]
  %s1 = inlined_call_operand.hbm [shape: s32[2,1,256], index: 1, kind: input, shape index: {}]
  %s2 = inlined_call_operand.hbm [shape: f32[2,1,1,256], index: 2, kind: output, shape index: {}]
  %s3 = sld [smem:[#allocation0]]
  $region30: #{tpu_custom_call.1} parent=0
    _
  %s5 = ssub.s32 1, %s3
  %s6 = scalar_select 0, %s5, %s3
  $region1: #{tpu_custom_call.1} parent=0
    #allocation2 [shape = 'u8[8192]{0}', space=vmem, size = 0x2000, scoped, tag = 'input window, operand 0, single buffered']
    #allocation3 [shape = 's32[1]{0}', space=sflag, size = 0x4, scoped, tag = 'scoped memory for tpu_custom_call.1']
    #allocation4 [shape = 's32[1]{0}', space=sflag, size = 0x4, scoped, tag = 'scoped memory for tpu_custom_call.1']
    #allocation5 [shape = 'u8[2048]{0}', space=vmem, size = 0x800, scoped, tag = 'input window, operand 1, single buffered']
    #allocation6 [shape = 's32[1]{0}', space=sflag, size = 0x4, scoped, tag = 'scoped memory for tpu_custom_call.1']
    #allocation7 [shape = 'u8[2048]{0}', space=vmem, size = 0x800, scoped, tag = 'output window, operand 0, single buffered']
    %7 = vsyncpa [#allocation3], 0
    %8 = vsyncpa [#allocation6], 0
    %9 = vsyncpa [#allocation4], 0
    // Predicated region
    $region2: #{tpu_custom_call.1} parent=1 // pred_check
      _
    $region3: #{tpu_custom_call.1} parent=1 // pred_check_branch
      %11 = sbr.rel (0) target = $region5
    $region4: #{tpu_custom_call.1} parent=1 // pred_region
      %s12 = sadd.s32 0, 0
      %s13 = smul.u32 2, %s12
      %s15 = ssub.s32 256, 256
      %16 = vsyncadd [#allocation3], %s15
      %s17 = smul.addr %s13, 64
      %s18 = scalar_lea.hbm %s0, %s17
      %s19 = sshll.u32 [#allocation2], 4
      %s20 = int_to_ptr.vmem [resolvable:$true] %s19
      %25 = dma.hbm_to_vmem [thread:$0]  %s18, 256, %s20, [#allocation3], 128, 128, 8
    $region5: #{tpu_custom_call.1} parent=1 // pred_fallthru
      _
    // Predicated region
    $region6: #{tpu_custom_call.1} parent=1 // pred_check
      _
    $region7: #{tpu_custom_call.1} parent=1 // pred_check_branch
      %27 = sbr.rel (0) target = $region9
    $region8: #{tpu_custom_call.1} parent=1 // pred_region
      %s28 = sadd.s32 0, 0
      %s29 = smul.u32 2, %s28
      %s31 = ssub.s32 64, 64
      %32 = vsyncadd [#allocation6], %s31
      %s33 = smul.addr %s29, 16
      %s34 = scalar_lea.hbm %s1, %s33
      %s35 = sshll.u32 [#allocation5], 4
      %s36 = int_to_ptr.vmem [resolvable:$true] %s35
      %41 = dma.hbm_to_vmem [thread:$0]  %s34, 64, %s36, [#allocation6], 32, 32, 2
    $region9: #{tpu_custom_call.1} parent=1 // pred_fallthru
      _
    // Predicated region
    $region10: #{tpu_custom_call.1} parent=1 // pred_check
      _
    $region11: #{tpu_custom_call.1} parent=1 // pred_check_branch
      %43 = sbr.rel (0) target = $region13
    $region12: #{tpu_custom_call.1} parent=1 // pred_region
      %44 = dma.done [#allocation3], 256
    $region13: #{tpu_custom_call.1} parent=1 // pred_fallthru
      _
    // Predicated region
    $region14: #{tpu_custom_call.1} parent=1 // pred_check
      _
    $region15: #{tpu_custom_call.1} parent=1 // pred_check_branch
      %46 = sbr.rel (0) target = $region17
    $region16: #{tpu_custom_call.1} parent=1 // pred_region
      %47 = dma.done [#allocation6], 64
    $region17: #{tpu_custom_call.1} parent=1 // pred_fallthru
      _
    %s48 = sadd.s32 0, 0
    %s49 = smul.u32 2, %s48
    %s50 = sadd.s32 0, 0
    %s51 = smul.u32 2, %s50
    %p52 = scmp.eq.s32.totalorder 0, 0
    // Predicated region
    $region18: #{tpu_custom_call.1} parent=1 // pred_check
      %p53 = pneg %p52
    $region19: #{tpu_custom_call.1} parent=1 // pred_check_branch
      %55 = sbr.rel (%p53) target = $region21
    $region20: #{tpu_custom_call.1} parent=1 // pred_region
      %v56 = vlaneseq
      %vm57 = vcmp.ge.s32.totalorder %v56, 0
      %vm58 = vcmp.lt.s32.totalorder %v56, 256
      %vm59 = vmand %vm57, %vm58
      %60 = vst.msk [vmem:[#allocation7] sm:$0x3] %vm59, 0.0
      %61 = vst.msk [vmem:[#allocation7 + $0x2] sm:$0x3] %vm59, 0.0
    $region21: #{tpu_custom_call.1} parent=1 // pred_fallthru
      _
    %v62 = vld [vmem:[#allocation2] sm:$0xff]
    %v63 = vld [vmem:[#allocation2 + $0x8] sm:$0xff]
    %v64 = vld [vmem:[#allocation5] sm:$0x3]
    %v65 = vld [vmem:[#allocation5 + $0x2] sm:$0x3]
    %v68 = vcombine.high %v62, %v62
    %v69 = vcombine.high %v63, %v63
    %vm72 = vcmask 1043456
    %v73 = vsel %vm72, %v62, -inf
    %v74 = vrot.slane %v73, 4
    %v75 = vmax.f32 %v73, %v74
    %v76 = vrot.slane %v75, 2
    %v77 = vmax.f32 %v75, %v76
    %v78 = vrot.slane %v77, 1
    %v79 = vmax.f32 %v77, %v78
    %v80 = vsel %vm72, %v68, -inf
    %v81 = vrot.slane %v80, 4
    %v82 = vmax.f32 %v80, %v81
    %v83 = vrot.slane %v82, 2
    %v84 = vmax.f32 %v82, %v83
    %v85 = vrot.slane %v84, 1
    %v86 = vmax.f32 %v84, %v85
    %v87 = vsel %vm72, %v63, -inf
    %v88 = vrot.slane %v87, 4
    %v89 = vmax.f32 %v87, %v88
    %v90 = vrot.slane %v89, 2
    %v91 = vmax.f32 %v89, %v90
    %v92 = vrot.slane %v91, 1
    %v93 = vmax.f32 %v91, %v92
    %v94 = vsel %vm72, %v69, -inf
    %v95 = vrot.slane %v94, 4
    %v96 = vmax.f32 %v94, %v95
    %v97 = vrot.slane %v96, 2
    %v98 = vmax.f32 %v96, %v97
    %v99 = vrot.slane %v98, 1
    %v100 = vmax.f32 %v98, %v99
    %v105 = vcombine.low %v79, %v86
    %v106 = vcombine.low %v93, %v100
    %v109 = vsub.f32 %v62, %v105
    %v110 = vsub.f32 %v63, %v106
    %v111 = vmul.f32 %v109, 1.442695
    %v112 = vpow.pop %v111
    %v113 = vmul.f32 %v110, 1.442695
    %v114 = vpow.pop %v113
    %v117 = vcombine.high %v112, %v112
    %v118 = vcombine.high %v114, %v114
    %v121 = vsel %vm72, %v112, 0.0
    %v122 = vrot.slane %v121, 4
    %v123 = vadd.f32 %v121, %v122
    %v124 = vrot.slane %v123, 2
    %v125 = vadd.f32 %v123, %v124
    %v126 = vrot.slane %v125, 1
    %v127 = vadd.f32 %v125, %v126
    %v128 = vsel %vm72, %v117, 0.0
    %v129 = vrot.slane %v128, 4
    %v130 = vadd.f32 %v128, %v129
    %v131 = vrot.slane %v130, 2
    %v132 = vadd.f32 %v130, %v131
    %v133 = vrot.slane %v132, 1
    %v134 = vadd.f32 %v132, %v133
    %v135 = vsel %vm72, %v114, 0.0
    %v136 = vrot.slane %v135, 4
    %v137 = vadd.f32 %v135, %v136
    %v138 = vrot.slane %v137, 2
    %v139 = vadd.f32 %v137, %v138
    %v140 = vrot.slane %v139, 1
    %v141 = vadd.f32 %v139, %v140
    %v142 = vsel %vm72, %v118, 0.0
    %v143 = vrot.slane %v142, 4
    %v144 = vadd.f32 %v142, %v143
    %v145 = vrot.slane %v144, 2
    %v146 = vadd.f32 %v144, %v145
    %v147 = vrot.slane %v146, 1
    %v148 = vadd.f32 %v146, %v147
    %v149 = vlaneseq
    %v150 = vshrl.u32 %v149, 7
    %v151 = vlaneseq
    %v152 = vshrl.u32 %v151, 7
    %v153 = vsub.s32 0, %v152
    %v154 = vrot.slane %v64, %v153
    %v155 = vlaneseq
    %v156 = vshrl.u32 %v155, 7
    %v157 = vsub.s32 1, %v156
    %v158 = vrot.slane %v64, %v157
    %v159 = vlaneseq
    %v160 = vshrl.u32 %v159, 7
    %v161 = vsub.s32 0, %v160
    %v162 = vrot.slane %v65, %v161
    %v163 = vlaneseq
    %v164 = vshrl.u32 %v163, 7
    %v165 = vsub.s32 1, %v164
    %v166 = vrot.slane %v65, %v165
    %vm167 = vcmp.eq.s32.totalorder %v150, %v154
    %vm168 = vcmp.eq.s32.totalorder %v150, %v158
    %vm169 = vcmp.eq.s32.totalorder %v150, %v162
    %vm170 = vcmp.eq.s32.totalorder %v150, %v166
    %v173 = vcombine.high %v109, %v109
    %v174 = vcombine.high %v110, %v110
    %v177 = vsel %vm167, %v109, 0.0
    %v178 = vsel %vm168, %v173, 0.0
    %v179 = vsel %vm169, %v110, 0.0
    %v180 = vsel %vm170, %v174, 0.0
    %v181 = vsel %vm72, %v177, 0.0
    %v182 = vrot.slane %v181, 4
    %v183 = vadd.f32 %v181, %v182
    %v184 = vrot.slane %v183, 2
    %v185 = vadd.f32 %v183, %v184
    %v186 = vrot.slane %v185, 1
    %v187 = vadd.f32 %v185, %v186
    %v188 = vsel %vm72, %v178, 0.0
    %v189 = vrot.slane %v188, 4
    %v190 = vadd.f32 %v188, %v189
    %v191 = vrot.slane %v190, 2
    %v192 = vadd.f32 %v190, %v191
    %v193 = vrot.slane %v192, 1
    %v194 = vadd.f32 %v192, %v193
    %v195 = vsel %vm72, %v179, 0.0
    %v196 = vrot.slane %v195, 4
    %v197 = vadd.f32 %v195, %v196
    %v198 = vrot.slane %v197, 2
    %v199 = vadd.f32 %v197, %v198
    %v200 = vrot.slane %v199, 1
    %v201 = vadd.f32 %v199, %v200
    %v202 = vsel %vm72, %v180, 0.0
    %v203 = vrot.slane %v202, 4
    %v204 = vadd.f32 %v202, %v203
    %v205 = vrot.slane %v204, 2
    %v206 = vadd.f32 %v204, %v205
    %v207 = vrot.slane %v206, 1
    %v208 = vadd.f32 %v206, %v207
    %v209 = vsel %vm167, %v112, 0.0
    %v210 = vsel %vm168, %v117, 0.0
    %v211 = vsel %vm169, %v114, 0.0
    %v212 = vsel %vm170, %v118, 0.0
    %v213 = vsel %vm72, %v209, 0.0
    %v214 = vrot.slane %v213, 4
    %v215 = vadd.f32 %v213, %v214
    %v216 = vrot.slane %v215, 2
    %v217 = vadd.f32 %v215, %v216
    %v218 = vrot.slane %v217, 1
    %v219 = vadd.f32 %v217, %v218
    %v220 = vsel %vm72, %v210, 0.0
    %v221 = vrot.slane %v220, 4
    %v222 = vadd.f32 %v220, %v221
    %v223 = vrot.slane %v222, 2
    %v224 = vadd.f32 %v222, %v223
    %v225 = vrot.slane %v224, 1
    %v226 = vadd.f32 %v224, %v225
    %v227 = vsel %vm72, %v211, 0.0
    %v228 = vrot.slane %v227, 4
    %v229 = vadd.f32 %v227, %v228
    %v230 = vrot.slane %v229, 2
    %v231 = vadd.f32 %v229, %v230
    %v232 = vrot.slane %v231, 1
    %v233 = vadd.f32 %v231, %v232
    %v234 = vsel %vm72, %v212, 0.0
    %v235 = vrot.slane %v234, 4
    %v236 = vadd.f32 %v234, %v235
    %v237 = vrot.slane %v236, 2
    %v238 = vadd.f32 %v236, %v237
    %v239 = vrot.slane %v238, 1
    %v240 = vadd.f32 %v238, %v239
    %v241 = vlog2.pop %v127
    %v242 = vmul.f32 %v241, 0.6931472
    %v243 = vlog2.pop %v134
    %v244 = vmul.f32 %v243, 0.6931472
    %v245 = vlog2.pop %v141
    %v246 = vmul.f32 %v245, 0.6931472
    %v247 = vlog2.pop %v148
    %v248 = vmul.f32 %v247, 0.6931472
    %v249 = vsub.f32 %v187, %v242
    %v250 = vsub.f32 %v194, %v244
    %v251 = vsub.f32 %v201, %v246
    %v252 = vsub.f32 %v208, %v248
    %v253 = vrcp.pop %v127
    %v254 = vrcp.pop %v134
    %v255 = vrcp.pop %v141
    %v256 = vrcp.pop %v148
    %v257 = vmul.f32 %v219, %v253
    %v258 = vmul.f32 %v226, %v254
    %v259 = vmul.f32 %v233, %v255
    %v260 = vmul.f32 %v240, %v256
    %v261 = vsub.f32 1.0, %v257
    %v262 = vsub.f32 1.0, %v258
    %v263 = vsub.f32 1.0, %v259
    %v264 = vsub.f32 1.0, %v260
    %v265 = vmax.f32 %v261, 0.0
    %v266 = vmax.f32 %v262, 0.0
    %v267 = vmax.f32 %v263, 0.0
    %v268 = vmax.f32 %v264, 0.0
    %v269 = vmul.f32 %v265, %v265
    %v270 = vmul.f32 %v266, %v266
    %v271 = vmul.f32 %v267, %v267
    %v272 = vmul.f32 %v268, %v268
    %v273 = vmul.f32 %v265, %v269
    %v274 = vmul.f32 %v266, %v270
    %v275 = vmul.f32 %v267, %v271
    %v276 = vmul.f32 %v268, %v272
    %v277 = vmul.f32 %v269, %v269
    %v278 = vmul.f32 %v270, %v270
    %v279 = vmul.f32 %v271, %v271
    %v280 = vmul.f32 %v272, %v272
    %v281 = vmul.f32 %v273, %v277
    %v282 = vmul.f32 %v274, %v278
    %v283 = vmul.f32 %v275, %v279
    %v284 = vmul.f32 %v276, %v280
    %v285 = vsub.f32 0.0, %v281
    %v286 = vsub.f32 0.0, %v282
    %v287 = vsub.f32 0.0, %v283
    %v288 = vsub.f32 0.0, %v284
    %v289 = vmul.f32 %v285, %v249
    %v290 = vmul.f32 %v286, %v250
    %v291 = vmul.f32 %v287, %v251
    %v292 = vmul.f32 %v288, %v252
    %v293 = vld [vmem:[#allocation7] sm:$0x3]
    %v294 = vld [vmem:[#allocation7 + $0x2] sm:$0x3]
    %v299 = vcombine.low %v289, %v290
    %v301 = vunpack.c.l.s4 1966171168
    %v302 = vunpack.c.0.s8 %v301
    %v303 = vlaneseq
    %v304 = vshrl.u32 %v303, 7
    %v305 = vsub.s32 %v302, %v304
    %v306 = vrot.slane %v299, %v305
    %v308 = vunpack.c.l.s4 1966171168
    %v309 = vunpack.c.0.s8 %v308
    %v310 = vlaneseq
    %v311 = vshrl.u32 %v310, 7
    %v312 = vsub.s32 %v309, %v311
    %v313 = vrot.slane %v306, %v312
    %v314 = vcombine.low %v291, %v292
    %v316 = vunpack.c.l.s4 1966171168
    %v317 = vunpack.c.0.s8 %v316
    %v318 = vlaneseq
    %v319 = vshrl.u32 %v318, 7
    %v320 = vsub.s32 %v317, %v319
    %v321 = vrot.slane %v314, %v320
    %v323 = vunpack.c.l.s4 1966171168
    %v324 = vunpack.c.0.s8 %v323
    %v325 = vlaneseq
    %v326 = vshrl.u32 %v325, 7
    %v327 = vsub.s32 %v324, %v326
    %v328 = vrot.slane %v321, %v327
    %v331 = vadd.f32 %v293, %v313
    %v332 = vadd.f32 %v294, %v328
    %v333 = vlaneseq
    %vm334 = vcmp.ge.s32.totalorder %v333, 0
    %vm335 = vcmp.lt.s32.totalorder %v333, 256
    %vm336 = vmand %vm334, %vm335
    %337 = vst.msk [vmem:[#allocation7] sm:$0x3] %vm336, %v331
    %338 = vst.msk [vmem:[#allocation7 + $0x2] sm:$0x3] %vm336, %v332
    // Predicated region
    $region22: #{tpu_custom_call.1} parent=1 // pred_check
      _
    $region23: #{tpu_custom_call.1} parent=1 // pred_check_branch
      %340 = sbr.rel (0) target = $region25
    $region24: #{tpu_custom_call.1} parent=1 // pred_region
      %s342 = ssub.s32 64, 64
      %343 = vsyncadd [#allocation4], %s342
      %s344 = sshll.u32 [#allocation7], 4
      %s345 = int_to_ptr.vmem [resolvable:$true] %s344
      %350 = dma.vmem_to_hbm [thread:$0]  %s345, 64, %s2, [#allocation4], 32, 32, 2
    $region25: #{tpu_custom_call.1} parent=1 // pred_fallthru
      _
    // Predicated region
    $region26: #{tpu_custom_call.1} parent=1 // pred_check
      _
    $region27: #{tpu_custom_call.1} parent=1 // pred_check_branch
      %352 = sbr.rel (0) target = $region29
    $region28: #{tpu_custom_call.1} parent=1 // pred_region
      %353 = dma.done [#allocation4], 64
    $region29: #{tpu_custom_call.1} parent=1 // pred_fallthru
      _
    %354 = vsyncpa [#allocation3], 1
    %355 = vsyncpa [#allocation6], 1
    %356 = vsyncpa [#allocation4], 1

</llo_original>
